<compile_context>
chip_gen: v5e
topology: v5e:2x2
jax: 0.10.0
libtpu: 0.0.40
codegen_flags: <defaults>
</compile_context>

<pallas_src>
import math

import jax
import jax.numpy as jnp
from jax.experimental import pallas as pl
from jax.experimental.pallas import tpu as pltpu


def _broadcast_kernel(const_ref, out_ref):
    # const_ref: (1, tf) tile of the (possibly repacked) flattened constant.
    # out_ref:   (tb, tf) lane-dense output tile for this grid step.
    out_ref[...] = jnp.broadcast_to(const_ref[...], out_ref.shape)


def _per_block_budget_bytes() -> int:
    """Per-output-block (single-buffer) VMEM budget, generation aware."""
    try:
        kind = jax.devices()[0].device_kind.lower()
    except Exception:
        kind = ""
    if "v6" in kind:
        # v6e: 32 MiB scoped default -> 8 MiB block (x2 double-buffer = 16 MiB)
        # amortizes per-step pipeline overhead a bit better.
        return 8 * 1024 * 1024
    # Conservative default: safe under v5e's 16 MiB scoped default and well
    # inside v7x's 64 MiB physical VMEM.
    return 4 * 1024 * 1024


def constant_input_forward(const_param: jax.Array, batch: int) -> jax.Array:
    """Pallas equivalent of ConstantInput.forward(batch).

    const_param: (1, C, S, S) learned constant.
    returns:     (batch, C, S, S) == const_param repeated along batch.
    """
    _, C, S1, S2 = const_param.shape
    feat = C * S1 * S2
    dtype = const_param.dtype
    itemsize = jnp.dtype(dtype).itemsize
    # Packed sublane multiple: 8 rows for 4-byte, 16 for 2-byte, 32 for 1-byte.
    sub_mult = {4: 8, 2: 16, 1: 32}.get(itemsize, 8)

    # ---- 1) Lane-dense flattening ---------------------------------------
    if feat % 128 == 0:
        rep = 1
    else:
        rep = 128 // math.gcd(feat, 128)
        if batch % rep != 0:
            # Can't fold `rep` batch rows into one lane-dense row: fall back to
            # the (batch, feat) layout (correct, but masked partial stores).
            rep = 1

    if rep == 1:
        W = feat
        rows = batch
        const_row = const_param.reshape(1, feat)
    else:
        W = feat * rep                      # multiple of 128
        rows = batch // rep
        const_row = jnp.tile(const_param.reshape(1, feat), (1, rep))  # one-time

    # ---- 2) Tile sizing under an explicit VMEM budget --------------------
    budget = _per_block_budget_bytes()
    full_rows_fit = budget // (W * itemsize)  # full-width rows per budget

    if full_rows_fit >= rows:
        # Whole output fits in one block.
        tf = W
        tb = rows
    elif full_rows_fit >= sub_mult:
        # Tile the row (batch) dim only; round DOWN to the sublane multiple so
        # we never overshoot the budget (the old max(8, ...) bug).
        tf = W
        tb = (full_rows_fit // sub_mult) * sub_mult
    else:
        # A sublane-aligned group of rows at full width exceeds the budget:
        # split the feature dim into multiple-of-128 tiles sized so that
        # `sub_mult` rows always fit (bounds the block for any C*S*S).
        tf = max(128, (budget // (sub_mult * itemsize)) // 128 * 128)
        tb = rows if rows <= sub_mult else sub_mult

    # ---- 3) Guarantee >= 2 grid steps for non-trivial outputs ------------
    # v7x has 2 TensorCores: a single-step grid leaves half the chip's
    # store/DMA throughput idle on this writeback-bound op.  Extra steps cost
    # only ~0.35us on single-core generations, so apply unconditionally.
    total_out_bytes = rows * W * itemsize
    min_steps = 2 if total_out_bytes > 2 * 1024 * 1024 else 1
    nb, nf = pl.cdiv(rows, tb), pl.cdiv(W, tf)
    if nb * nf < min_steps:
        if rows >= 2 * sub_mult:
            tb = max(sub_mult, (rows // 2 // sub_mult) * sub_mult)
        else:
            tf = max(128, (tf // 2 // 128) * 128)
        nb, nf = pl.cdiv(rows, tb), pl.cdiv(W, tf)

    # ---- 4) The kernel ----------------------------------------------------
    out_flat = pl.pallas_call(
        _broadcast_kernel,
        out_shape=jax.ShapeDtypeStruct((rows, W), dtype),
        grid_spec=pl.GridSpec(
            grid=(nb, nf),
            in_specs=[
                # Constant stays resident along the row axis; only the feature
                # tile moves, so its double buffer is ~2*tf*itemsize.
                pl.BlockSpec((1, tf), lambda b, j: (0, j)),
            ],
            out_specs=pl.BlockSpec((tb, tf), lambda b, j: (b, j)),
        ),
        compiler_params=pltpu.CompilerParams(
            dimension_semantics=("parallel", "parallel"),
            # Explicit headroom, <= physical VMEM on every generation
            # (v5e/v6e 128 MiB, v7x 64 MiB); actual per-step usage is
            # ~2*(tb+1)*tf*itemsize, bounded by the budget above.
            vmem_limit_bytes=32 * 1024 * 1024,
        ),
    )(const_row)

    # Free row-major reshape back to the NCHW repeat layout.
    return out_flat.reshape(batch, C, S1, S2)


def _check(channel, size, batch, key):
    const_param = jax.random.normal(
        key, (1, channel, size, size), dtype=jnp.float32
    )
    out = jax.block_until_ready(constant_input_forward(const_param, batch))
    ref = jnp.broadcast_to(const_param, (batch, channel, size, size))
    assert out.shape == (batch, channel, size, size)
    assert jnp.array_equal(out, ref), f"mismatch C={channel} S={size} B={batch}"


if __name__ == "__main__":
    key = jax.random.PRNGKey(0)
    k0, k1, k2 = jax.random.split(key, 3)

    # Module's default small shape: batch=2, channel=4, size=4 (F=64) —
    # exercises the lane-dense repack path (W=128, rows=1).
    _check(channel=4, size=4, batch=2, key=k0)
    # F already a multiple of 128 (no repack): channel=32, size=4 -> F=512.
    _check(channel=32, size=4, batch=3, key=k1)
    # Odd batch with F % 128 != 0 -> correctness fallback (batch, F) layout.
    _check(channel=4, size=4, batch=3, key=k2)

    print("KERNEL_OK")
</pallas_src>

<mosaic_0001>
module attributes {stable_mosaic.version = 11 : i64} {
  func.func @_broadcast_kernel(%arg0: i32, %arg1: i32, %arg2: memref<1x128xf32, #tpu.memory_space<vmem>>, %arg3: memref<1x128xf32, #tpu.memory_space<vmem>>) attributes {dimension_semantics = [#tpu.dimension_semantics<parallel>, #tpu.dimension_semantics<parallel>], iteration_bounds = array<i64: 1, 1>, scalar_prefetch = 0 : i64, scratch_operands = 0 : i64, tpu.core_type = #tpu.core_type<tc>, window_params = [{transform_indices = @transform_0, window_bounds = array<i64: 1, 128>}, {transform_indices = @transform_1, window_bounds = array<i64: 1, 128>}]} {
    %c0 = arith.constant 0 : index
    %c0_0 = arith.constant 0 : index
    %0 = vector.load %arg2[%c0, %c0_0] : memref<1x128xf32, #tpu.memory_space<vmem>>, vector<1x128xf32>
    %c0_1 = arith.constant 0 : index
    %c0_2 = arith.constant 0 : index
    %1 = vector.load %arg3[%c0_1, %c0_2] : memref<1x128xf32, #tpu.memory_space<vmem>>, vector<1x128xf32>
    tpu.vector_store %arg3[%c0_1, %c0_2], %0 {strides = array<i32>} : memref<1x128xf32, #tpu.memory_space<vmem>>, vector<1x128xf32>,
    return
  }
  func.func @transform_0(%arg0: i32, %arg1: i32) -> (i32, i32) {
    %c0_i32 = arith.constant 0 : i32
    %c0_i32_0 = arith.constant 0 : i32
    return %c0_i32, %arg1 : i32, i32
  }
  func.func @transform_1(%arg0: i32, %arg1: i32) -> (i32, i32) {
    %c0_i32 = arith.constant 0 : i32
    return %arg0, %arg1 : i32, i32
  }
}

</mosaic_0001>

<llo_original>
// kernel: tpu_custom_call.1
$region0: #{tpu_custom_call.1}
  #allocation0 [shape = 'u32[]', space=smem, size = 0x4, offset = 0x4, fixed_abs, tag = 'smem constant byte address 0x4 - core index']
  #allocation1 [shape = 'u32[72,128]{1,0:T(1,128)}', space=vmem, size = 0x9000, scoped, tag = 'internal scratch']
  %s0 = inlined_call_operand.hbm [shape: f32[1,128], index: 0, kind: input, shape index: {}]
  %s1 = inlined_call_operand.hbm [shape: f32[1,128], index: 1, kind: output, shape index: {}]
  %s2 = sld [smem:[#allocation0]]
  $region18: #{tpu_custom_call.1} parent=0
    _
  %s4 = ssub.s32 1, %s2
  %s5 = scalar_select 0, %s4, %s2
  $region1: #{tpu_custom_call.1} parent=0
    #allocation2 [shape = 'u8[512]{0}', space=vmem, size = 0x400, scoped, tag = 'input window, operand 0, single buffered']
    #allocation3 [shape = 's32[1]{0}', space=sflag, size = 0x4, scoped, tag = 'scoped memory for tpu_custom_call.1']
    #allocation4 [shape = 's32[1]{0}', space=sflag, size = 0x4, scoped, tag = 'scoped memory for tpu_custom_call.1']
    #allocation5 [shape = 'u8[512]{0}', space=vmem, size = 0x400, scoped, tag = 'output window, operand 0, single buffered']
    %6 = vsyncpa [#allocation3], 0
    %7 = vsyncpa [#allocation4], 0
    // Predicated region
    $region2: #{tpu_custom_call.1} parent=1 // pred_check
      _
    $region3: #{tpu_custom_call.1} parent=1 // pred_check_branch
      %9 = sbr.rel (0) target = $region5
    $region4: #{tpu_custom_call.1} parent=1 // pred_region
      %11 = vsyncadd [#allocation3], 0
      %s13 = sshll.u32 %s0, 4
      %s14 = int_to_ptr.hbm [resolvable:$true] %s13
      %s15 = sshll.u32 [#allocation2], 4
      %s16 = int_to_ptr.vmem [resolvable:$true] %s15
      %18 = dma.hbm_to_vmem [thread:$0]  %s14, 16, %s16, [#allocation3]
    $region5: #{tpu_custom_call.1} parent=1 // pred_fallthru
      _
    // Predicated region
    $region6: #{tpu_custom_call.1} parent=1 // pred_check
      _
    $region7: #{tpu_custom_call.1} parent=1 // pred_check_branch
      %20 = sbr.rel (0) target = $region9
    $region8: #{tpu_custom_call.1} parent=1 // pred_region
      %22 = dma.done [#allocation3], 16
    $region9: #{tpu_custom_call.1} parent=1 // pred_fallthru
      _
    %v23 = vld [vmem:[#allocation2] sm:$0x1]
    %24 = vst [vmem:[#allocation5] sm:$0x1] %v23
    // Predicated region
    $region10: #{tpu_custom_call.1} parent=1 // pred_check
      _
    $region11: #{tpu_custom_call.1} parent=1 // pred_check_branch
      %26 = sbr.rel (0) target = $region13
    $region12: #{tpu_custom_call.1} parent=1 // pred_region
      %28 = vsyncadd [#allocation4], 0
      %s30 = sshll.u32 [#allocation5], 4
      %s31 = int_to_ptr.vmem [resolvable:$true] %s30
      %s32 = sshll.u32 %s1, 4
      %s33 = int_to_ptr.hbm [resolvable:$true] %s32
      %35 = dma.vmem_to_hbm [thread:$0]  %s31, 16, %s33, [#allocation4]
    $region13: #{tpu_custom_call.1} parent=1 // pred_fallthru
      _
    // Predicated region
    $region14: #{tpu_custom_call.1} parent=1 // pred_check
      _
    $region15: #{tpu_custom_call.1} parent=1 // pred_check_branch
      %37 = sbr.rel (0) target = $region17
    $region16: #{tpu_custom_call.1} parent=1 // pred_region
      %39 = dma.done [#allocation4], 16
    $region17: #{tpu_custom_call.1} parent=1 // pred_fallthru
      _
    %40 = vsyncpa [#allocation3], 1
    %41 = vsyncpa [#allocation4], 1

</llo_original>
